<compile_context>
chip_gen: v7x
topology: tpu7x:2x2x1
jax: 0.10.0
libtpu: 0.0.40
codegen_flags: <defaults>
</compile_context>

<pallas_src>
import jax
import jax.numpy as jnp
from jax import lax
from jax.experimental import pallas as pl
from jax.experimental.pallas import tpu as pltpu

# Module dimensions from the PyTorch spec.
IN_DIM = 20
HID_DIM = 10
LABEL_NUM = 2
BATCH_SIZE = 2


def _testg_kernel(x_ref, w1_ref, b1_ref, w2_ref, b2_ref, out_ref):
    # x_ref:  (TB, inDim)          w1_ref: (inDim, hidDim)   b1_ref: (1, hidDim)
    # w2_ref: (labelNum, hidDim)   b2_ref: (labelNum, 1)     out_ref: (labelNum, TB)
    x = x_ref[...].astype(jnp.float32)

    # Fc1 + ReLU (default matmul precision, f32 accumulation on the MXU).
    h1 = jnp.dot(x, w1_ref[...].astype(jnp.float32),
                 preferred_element_type=jnp.float32)
    h1 = jnp.maximum(h1 + b1_ref[...].astype(jnp.float32), 0.0)

    # Fc2 computed directly in transposed (lane-dense) form:
    #   logits_t[c, b] = sum_h W2[c, h] * h1[b, h]   -> (labelNum, TB)
    logits_t = lax.dot_general(
        w2_ref[...].astype(jnp.float32), h1,
        dimension_numbers=(((1,), (1,)), ((), ())),
        preferred_element_type=jnp.float32)
    logits_t = logits_t + b2_ref[...].astype(jnp.float32)   # (labelNum,1) bcast

    label_num = out_ref.shape[0]
    if label_num == 2:
        # Two-class stable softmax: purely elementwise on two sublane rows
        # (VPU compares/adds + EUP exps), no cross-lane reductions.
        l0 = logits_t[0:1, :]
        l1 = logits_t[1:2, :]
        m = jnp.maximum(l0, l1)
        e0 = jnp.exp(l0 - m)
        e1 = jnp.exp(l1 - m)
        inv = 1.0 / (e0 + e1)
        out_ref[0:1, :] = (e0 * inv).astype(out_ref.dtype)
        out_ref[1:2, :] = (e1 * inv).astype(out_ref.dtype)
    else:
        # Generic stable softmax over the (small) class/sublane axis.
        m = jnp.max(logits_t, axis=0, keepdims=True)
        e = jnp.exp(logits_t - m)
        out_ref[...] = (e / jnp.sum(e, axis=0, keepdims=True)).astype(out_ref.dtype)


def testg_forward(x, w1, b1, w2, b2, *, tile_b=8192):
    """x: (B, inDim); w1: (hidDim, inDim); b1: (hidDim,);
       w2: (labelNum, hidDim); b2: (labelNum,). Returns (B, labelNum) f32."""
    B, in_dim = x.shape
    hid_dim = w1.shape[0]
    label_num = w2.shape[0]

    # Pre-transpose W1 once (tiny); biases shaped for in-kernel broadcasting.
    w1t = jnp.transpose(w1)                  # (inDim, hidDim)
    b1r = jnp.reshape(b1, (1, hid_dim))      # (1, hidDim)
    b2c = jnp.reshape(b2, (label_num, 1))    # (labelNum, 1)

    # Batch tiling: full-array single block for small B, else TB-row tiles
    # (TB is a multiple of 8 and 128).  No padding copy of x — the ragged
    # last tile is handled by Pallas edge-block masking.
    tb = B if B <= tile_b else tile_b
    grid = (pl.cdiv(B, tb),)

    dtype_bytes = jnp.dtype(x.dtype).itemsize
    cost = pl.CostEstimate(
        flops=2 * B * (in_dim * hid_dim + hid_dim * label_num),
        transcendentals=B * label_num,
        bytes_accessed=B * (in_dim * dtype_bytes + label_num * 4)
        + 4 * (in_dim * hid_dim + hid_dim + hid_dim * label_num + label_num),
    )

    out_t = pl.pallas_call(
        _testg_kernel,
        out_shape=jax.ShapeDtypeStruct((label_num, B), jnp.float32),
        grid_spec=pltpu.PrefetchScalarGridSpec(
            num_scalar_prefetch=0,
            grid=grid,
            in_specs=[
                pl.BlockSpec((tb, in_dim), lambda i: (i, 0)),           # x tile
                pl.BlockSpec((in_dim, hid_dim), lambda i: (0, 0)),      # W1^T
                pl.BlockSpec((1, hid_dim), lambda i: (0, 0)),           # b1
                pl.BlockSpec((label_num, hid_dim), lambda i: (0, 0)),   # W2
                pl.BlockSpec((label_num, 1), lambda i: (0, 0)),         # b2
            ],
            out_specs=pl.BlockSpec((label_num, tb), lambda i: (0, i)),  # lane-dense
        ),
        compiler_params=pltpu.CompilerParams(
            dimension_semantics=("parallel",)),   # independent batch tiles
        cost_estimate=cost,
    )(x, w1t, b1r, w2, b2c)

    return jnp.transpose(out_t)              # (B, labelNum)


def _reference(x, w1, b1, w2, b2):
    # Pure-JAX reference mirroring the PyTorch forward (default precision,
    # same MXU numerics as the kernel).
    h1 = jnp.maximum(jnp.dot(x, w1.T) + b1, 0.0)
    logits = jnp.dot(h1, w2.T) + b2
    return jax.nn.softmax(logits, axis=-1)


if __name__ == "__main__":
    key = jax.random.PRNGKey(0)
    kx, k1, k2, k3, k4 = jax.random.split(key, 5)

    # Shapes implied by the module: batch=2, inDim=20, hidDim=10, labelNum=2.
    x = jax.random.normal(kx, (BATCH_SIZE, IN_DIM), dtype=jnp.float32)
    w1 = jax.random.normal(k1, (HID_DIM, IN_DIM), dtype=jnp.float32) * 0.1
    b1 = jax.random.normal(k2, (HID_DIM,), dtype=jnp.float32) * 0.1
    w2 = jax.random.normal(k3, (LABEL_NUM, HID_DIM), dtype=jnp.float32) * 0.1
    b2 = jax.random.normal(k4, (LABEL_NUM,), dtype=jnp.float32) * 0.1

    out = jax.block_until_ready(testg_forward(x, w1, b1, w2, b2))
    ref = _reference(x, w1, b1, w2, b2)
    assert out.shape == (BATCH_SIZE, LABEL_NUM), out.shape
    assert bool(jnp.all(jnp.abs(jnp.sum(out, axis=-1) - 1.0) < 1e-5))
    assert jnp.allclose(out, ref, atol=2e-3, rtol=2e-3), (out, ref)

    # Also exercise the multi-tile grid with a ragged last tile (no padding).
    xb = jax.random.normal(kx, (20000, IN_DIM), dtype=jnp.float32)
    outb = jax.block_until_ready(testg_forward(xb, w1, b1, w2, b2))
    refb = _reference(xb, w1, b1, w2, b2)
    assert outb.shape == (20000, LABEL_NUM)
    assert bool(jnp.all(jnp.abs(jnp.sum(outb, axis=-1) - 1.0) < 1e-5))
    assert jnp.allclose(outb, refb, atol=2e-3, rtol=2e-3)

    print("KERNEL_OK")
</pallas_src>

<mosaic_0001>
module attributes {stable_mosaic.version = 11 : i64} {
  func.func @_testg_kernel(%arg0: i32, %arg1: memref<2x20xf32, #tpu.memory_space<vmem>>, %arg2: memref<20x10xf32, #tpu.memory_space<vmem>>, %arg3: memref<1x10xf32, #tpu.memory_space<vmem>>, %arg4: memref<2x10xf32, #tpu.memory_space<vmem>>, %arg5: memref<2x1xf32, #tpu.memory_space<vmem>>, %arg6: memref<2x2xf32, #tpu.memory_space<vmem>>) attributes {dimension_semantics = [#tpu.dimension_semantics<parallel>], iteration_bounds = array<i64: 1>, scalar_prefetch = 0 : i64, scratch_operands = 0 : i64, tpu.core_type = #tpu.core_type<tc>, window_params = [{transform_indices = @transform_0, window_bounds = array<i64: 2, 20>}, {pipeline_mode = #tpu.pipeline_mode<synchronous>, transform_indices = @transform_1, window_bounds = array<i64: 20, 10>}, {pipeline_mode = #tpu.pipeline_mode<synchronous>, transform_indices = @transform_2, window_bounds = array<i64: 1, 10>}, {pipeline_mode = #tpu.pipeline_mode<synchronous>, transform_indices = @transform_3, window_bounds = array<i64: 2, 10>}, {pipeline_mode = #tpu.pipeline_mode<synchronous>, transform_indices = @transform_4, window_bounds = array<i64: 2, 1>}, {transform_indices = @transform_5, window_bounds = array<i64: 2, 2>}]} {
    %c0 = arith.constant 0 : index
    %c0_0 = arith.constant 0 : index
    %0 = vector.load %arg1[%c0, %c0_0] : memref<2x20xf32, #tpu.memory_space<vmem>>, vector<2x20xf32>
    %c0_1 = arith.constant 0 : index
    %c0_2 = arith.constant 0 : index
    %1 = vector.load %arg2[%c0_1, %c0_2] : memref<20x10xf32, #tpu.memory_space<vmem>>, vector<20x10xf32>
    %cst = arith.constant dense<0.000000e+00> : vector<2x10xf32>
    %2 = tpu.matmul %0, %1, %cst {dimension_numbers = #tpu.dot_dimension_numbers<[1], [0], [0], [1], [0, 0, 1, 1], [], []>} : vector<2x20xf32>, vector<20x10xf32>, vector<2x10xf32> -> vector<2x10xf32>
    %c0_3 = arith.constant 0 : index
    %c0_4 = arith.constant 0 : index
    %3 = vector.load %arg3[%c0_3, %c0_4] : memref<1x10xf32, #tpu.memory_space<vmem>>, vector<1x10xf32>
    %4 = vector.broadcast %3 : vector<1x10xf32> to vector<2x10xf32>
    %5 = arith.addf %2, %4 : vector<2x10xf32>
    %cst_5 = arith.constant 0.000000e+00 : f32
    %6 = vector.broadcast %cst_5 : f32 to vector<2x10xf32>
    %7 = arith.maximumf %5, %6 : vector<2x10xf32>
    %c0_6 = arith.constant 0 : index
    %c0_7 = arith.constant 0 : index
    %8 = vector.load %arg4[%c0_6, %c0_7] : memref<2x10xf32, #tpu.memory_space<vmem>>, vector<2x10xf32>
    %cst_8 = arith.constant dense<0.000000e+00> : vector<2x2xf32>
    %9 = tpu.matmul %8, %7, %cst_8 {dimension_numbers = #tpu.dot_dimension_numbers<[1], [1], [0], [0], [0, 0, 1, 0], [], []>} : vector<2x10xf32>, vector<2x10xf32>, vector<2x2xf32> -> vector<2x2xf32>
    %c0_9 = arith.constant 0 : index
    %c0_10 = arith.constant 0 : index
    %10 = vector.load %arg5[%c0_9, %c0_10] : memref<2x1xf32, #tpu.memory_space<vmem>>, vector<2x1xf32>
    %11 = vector.broadcast %10 : vector<2x1xf32> to vector<2x2xf32>
    %12 = arith.addf %9, %11 : vector<2x2xf32>
    %13 = vector.extract_strided_slice %12 {offsets = [0, 0], sizes = [1, 2], strides = [1, 1]} : vector<2x2xf32> to vector<1x2xf32>
    %14 = vector.extract_strided_slice %12 {offsets = [1, 0], sizes = [1, 2], strides = [1, 1]} : vector<2x2xf32> to vector<1x2xf32>
    %15 = arith.maximumf %13, %14 : vector<1x2xf32>
    %16 = arith.subf %13, %15 : vector<1x2xf32>
    %17 = math.exp %16 : vector<1x2xf32>
    %18 = arith.subf %14, %15 : vector<1x2xf32>
    %19 = math.exp %18 : vector<1x2xf32>
    %20 = arith.addf %17, %19 : vector<1x2xf32>
    %cst_11 = arith.constant 1.000000e+00 : f32
    %21 = vector.broadcast %cst_11 : f32 to vector<1x2xf32>
    %22 = arith.divf %21, %20 : vector<1x2xf32>
    %23 = arith.mulf %17, %22 : vector<1x2xf32>
    %c0_12 = arith.constant 0 : index
    %c0_13 = arith.constant 0 : index
    %24 = vector.load %arg6[%c0_12, %c0_13] : memref<2x2xf32, #tpu.memory_space<vmem>>, vector<1x2xf32>
    tpu.vector_store %arg6[%c0_12, %c0_13], %23 {strides = array<i32>} : memref<2x2xf32, #tpu.memory_space<vmem>>, vector<1x2xf32>,
    %25 = arith.mulf %19, %22 : vector<1x2xf32>
    %c1 = arith.constant 1 : index
    %c0_14 = arith.constant 0 : index
    %26 = vector.load %arg6[%c1, %c0_14] : memref<2x2xf32, #tpu.memory_space<vmem>>, vector<1x2xf32>
    tpu.vector_store %arg6[%c1, %c0_14], %25 {strides = array<i32>} : memref<2x2xf32, #tpu.memory_space<vmem>>, vector<1x2xf32>,
    return
  }
  func.func @transform_0(%arg0: i32) -> (i32, i32) {
    %c0_i32 = arith.constant 0 : i32
    %c0_i32_0 = arith.constant 0 : i32
    return %arg0, %c0_i32 : i32, i32
  }
  func.func @transform_1(%arg0: i32) -> (i32, i32) {
    %c0_i32 = arith.constant 0 : i32
    %c0_i32_0 = arith.constant 0 : i32
    %c0_i32_1 = arith.constant 0 : i32
    return %c0_i32, %c0_i32_0 : i32, i32
  }
  func.func @transform_2(%arg0: i32) -> (i32, i32) {
    %c0_i32 = arith.constant 0 : i32
    %c0_i32_0 = arith.constant 0 : i32
    %c0_i32_1 = arith.constant 0 : i32
    return %c0_i32, %c0_i32_0 : i32, i32
  }
  func.func @transform_3(%arg0: i32) -> (i32, i32) {
    %c0_i32 = arith.constant 0 : i32
    %c0_i32_0 = arith.constant 0 : i32
    %c0_i32_1 = arith.constant 0 : i32
    return %c0_i32, %c0_i32_0 : i32, i32
  }
  func.func @transform_4(%arg0: i32) -> (i32, i32) {
    %c0_i32 = arith.constant 0 : i32
    %c0_i32_0 = arith.constant 0 : i32
    %c0_i32_1 = arith.constant 0 : i32
    return %c0_i32, %c0_i32_0 : i32, i32
  }
  func.func @transform_5(%arg0: i32) -> (i32, i32) {
    %c0_i32 = arith.constant 0 : i32
    %c0_i32_0 = arith.constant 0 : i32
    return %c0_i32, %arg0 : i32, i32
  }
}

</mosaic_0001>

<llo_original>
// kernel: tpu_custom_call.1
$region0: #{tpu_custom_call.1}
  #allocation0 [shape = 'u32[]', space=smem, size = 0x4, offset = 0x4, fixed_abs, tag = 'smem constant byte address 0x4 - core index']
  #allocation1 [shape = 'u32[144,128]{1,0:T(1,128)}', space=vmem, size = 0x12000, scoped, tag = 'internal scratch']
  %s0 = inlined_call_operand.vmem [shape: f32[2,20], index: 0, kind: input, shape index: {}]
  %s1 = inlined_call_operand.vmem [shape: f32[20,10], index: 1, kind: input, shape index: {}]
  %s2 = inlined_call_operand.vmem [shape: f32[1,10], index: 2, kind: input, shape index: {}]
  %s3 = inlined_call_operand.vmem [shape: f32[2,10], index: 3, kind: input, shape index: {}]
  %s4 = inlined_call_operand.vmem [shape: f32[2,1], index: 4, kind: input, shape index: {}]
  %s5 = inlined_call_operand.hbm [shape: f32[2,2], index: 5, kind: output, shape index: {}]
  %s6 = sld [smem:[#allocation0]]
  $region30: #{tpu_custom_call.1} parent=0
    _
  %s8 = ssub.s32 1, %s6
  %s9 = scalar_select 0, %s8, %s6
  $region1: #{tpu_custom_call.1} parent=0
    #allocation2 [shape = 'u8[1024]{0}', space=vmem, size = 0x400, scoped, tag = 'output window, operand 0, single buffered']
    #allocation3 [shape = 's32[1]{0}', space=sflag, size = 0x4, scoped, tag = 'scoped memory for tpu_custom_call.1']
    %10 = vsyncpa [#allocation3], 0
    // Predicated region
    $region2: #{tpu_custom_call.1} parent=1 // pred_check
      _
    $region3: #{tpu_custom_call.1} parent=1 // pred_check_branch
      %12 = sbr.rel (0) target = $region5
    $region4: #{tpu_custom_call.1} parent=1 // pred_region
      _
    $region5: #{tpu_custom_call.1} parent=1 // pred_fallthru
      _
    // Predicated region
    $region6: #{tpu_custom_call.1} parent=1 // pred_check
      _
    $region7: #{tpu_custom_call.1} parent=1 // pred_check_branch
      %14 = sbr.rel (0) target = $region9
    $region8: #{tpu_custom_call.1} parent=1 // pred_region
      _
    $region9: #{tpu_custom_call.1} parent=1 // pred_fallthru
      _
    // Predicated region
    $region10: #{tpu_custom_call.1} parent=1 // pred_check
      _
    $region11: #{tpu_custom_call.1} parent=1 // pred_check_branch
      %16 = sbr.rel (0) target = $region13
    $region12: #{tpu_custom_call.1} parent=1 // pred_region
      _
    $region13: #{tpu_custom_call.1} parent=1 // pred_fallthru
      _
    // Predicated region
    $region14: #{tpu_custom_call.1} parent=1 // pred_check
      _
    $region15: #{tpu_custom_call.1} parent=1 // pred_check_branch
      %18 = sbr.rel (0) target = $region17
    $region16: #{tpu_custom_call.1} parent=1 // pred_region
      _
    $region17: #{tpu_custom_call.1} parent=1 // pred_fallthru
      _
    // Predicated region
    $region18: #{tpu_custom_call.1} parent=1 // pred_check
      _
    $region19: #{tpu_custom_call.1} parent=1 // pred_check_branch
      %20 = sbr.rel (0) target = $region21
    $region20: #{tpu_custom_call.1} parent=1 // pred_region
      _
    $region21: #{tpu_custom_call.1} parent=1 // pred_fallthru
      _
    %v21 = vld [vmem:[%s0] sm:$0x3]
    %v22 = vld [vmem:[%s1] sm:$0xff]
    %v23 = vld [vmem:[%s1 + $0x8] sm:$0xff]
    %v24 = vld [vmem:[%s1 + $0x10] sm:$0xf]
    %v25 = vld [vmem:[%s2] sm:$0x1]
    %v27 = vlaneseq
    %v28 = vshrl.u32 %v27, 7
    %v29 = vsub.s32 0, %v28
    %v30 = vrot.slane %v25, %v29
    %vm32 = vcmask 162816
    %v34 = vsel %vm32, %v21, 0
    %vm36 = vcmask 1043456
    %v38 = vsel %vm36, %v24, 0
    %40 = vmatprep.subr.mxu0 0.0
    %41 = vmatpush1.msra.mxu0 %v22
    %42 = vmatprep.subr.mxu0 0.0
    %43 = vmatpush1.msra.mxu0 %v23
    %44 = vmatprep.subr.mxu0 0.0
    %45 = vmatpush1.msra.mxu0 %v38
    %46 = vmatprep.subr.mxu0 0.0
    %47 = vmatpush1.msra.mxu0 0.0
    %48 = vmatprep.subr.mxu0 0.0
    %49 = vmatpush1.msra.mxu0 0.0
    %50 = vmatprep.subr.mxu0 0.0
    %51 = vmatpush1.msra.mxu0 0.0
    %52 = vmatprep.subr.mxu0 0.0
    %53 = vmatpush1.msra.mxu0 0.0
    %54 = vmatprep.subr.mxu0 0.0
    %55 = vmatpush1.msra.mxu0 0.0
    %56 = vmatprep.subr.mxu0 0.0
    %57 = vmatpush1.msra.mxu0 0.0
    %58 = vmatprep.subr.mxu0 0.0
    %59 = vmatpush1.msra.mxu0 0.0
    %60 = vmatprep.subr.mxu0 0.0
    %61 = vmatpush1.msra.mxu0 0.0
    %62 = vmatprep.subr.mxu0 0.0
    %63 = vmatpush1.msra.mxu0 0.0
    %64 = vmatprep.subr.mxu0 0.0
    %65 = vmatpush1.msra.mxu0 0.0
    %66 = vmatprep.subr.mxu0 0.0
    %67 = vmatpush1.msra.mxu0 0.0
    %68 = vmatprep.subr.mxu0 0.0
    %69 = vmatpush1.msra.mxu0 0.0
    %70 = vmatprep.subr.mxu0 0.0
    %71 = vmatpush1.msra.mxu0 0.0
    %72 = vmatprep.subr.mxu0 0.0
    %73 = vmatpush1.msra.mxu0 0.0
    %74 = vmatprep.subr.mxu0 0.0
    %75 = vmatpush1.msra.mxu0 0.0
    %76 = vmatprep.subr.mxu0 0.0
    %77 = vmatpush1.msra.mxu0 0.0
    %78 = vmatprep.subr.mxu0 0.0
    %79 = vmatpush1.msra.mxu0 0.0
    %80 = vmatprep.subr.mxu0 0.0
    %81 = vmatpush1.msra.mxu0 0.0
    %82 = vmatprep.subr.mxu0 0.0
    %83 = vmatpush1.msra.mxu0 0.0
    %84 = vmatprep.subr.mxu0 0.0
    %85 = vmatpush1.msra.mxu0 0.0
    %86 = vmatprep.subr.mxu0 0.0
    %87 = vmatpush1.msra.mxu0 0.0
    %88 = vmatprep.subr.mxu0 0.0
    %89 = vmatpush1.msra.mxu0 0.0
    %90 = vmatprep.subr.mxu0 0.0
    %91 = vmatpush1.msra.mxu0 0.0
    %92 = vmatprep.subr.mxu0 0.0
    %93 = vmatpush1.msra.mxu0 0.0
    %94 = vmatprep.subr.mxu0 0.0
    %95 = vmatpush1.msra.mxu0 0.0
    %96 = vmatprep.subr.mxu0 0.0
    %97 = vmatpush1.msra.mxu0 0.0
    %98 = vmatprep.subr.mxu0 0.0
    %99 = vmatpush1.msra.mxu0 0.0
    %100 = vmatprep.subr.mxu0 0.0
    %101 = vmatpush1.msra.mxu0 0.0
    %102 = vmatprep.subr.mxu0 0.0
    %103 = vmatpush1.msra.mxu0 0.0
    %104 = vmatprep.mubr.f32.mxu0 0.0
    %105 = vmatmul.mubr.f32.gmra.mrb[0].mxu0 %v34
    %v106 = vpop.f32.mrb[0].mxu0
    %v107 = vadd.f32 %v30, %v106
    %v108 = vpop.f32.mrb[0].mxu0
    %109 = vdwg.mxu0
    %v110 = vmax.f32 %v107, 0.0
    %v111 = vld [vmem:[%s3] sm:$0x3]
    %v112 = vld [vmem:[%s4] sm:$0x3]
    %114 = vset.pattern.permute.xlu0 0
    %115 = vperm.xlu0 %114, %v112
    %v116 = vpop.permute.xlu0 %115
    %vm118 = vcmask 80896
    %v120 = vsel %vm118, %v111, 0
    %v123 = vsel %vm118, %v110, 0
    %125 = vmatprep.subr.mxu0 0.0
    %126 = vmatpush1.xpose.msra.mxu0 %v123
    %127 = vmatprep.subr.mxu0 0.0
    %128 = vmatpush1.xpose.msra.mxu0 0.0
    %129 = vmatprep.subr.mxu0 0.0
    %130 = vmatpush1.xpose.msra.mxu0 0.0
    %131 = vmatprep.subr.mxu0 0.0
    %132 = vmatpush1.xpose.msra.mxu0 0.0
    %133 = vmatprep.subr.mxu0 0.0
    %134 = vmatpush1.xpose.msra.mxu0 0.0
    %135 = vmatprep.subr.mxu0 0.0
    %136 = vmatpush1.xpose.msra.mxu0 0.0
    %137 = vmatprep.subr.mxu0 0.0
    %138 = vmatpush1.xpose.msra.mxu0 0.0
    %139 = vmatprep.subr.mxu0 0.0
    %140 = vmatpush1.xpose.msra.mxu0 0.0
    %141 = vmatprep.subr.mxu0 0.0
    %142 = vmatpush1.xpose.msra.mxu0 0.0
    %143 = vmatprep.subr.mxu0 0.0
    %144 = vmatpush1.xpose.msra.mxu0 0.0
    %145 = vmatprep.subr.mxu0 0.0
    %146 = vmatpush1.xpose.msra.mxu0 0.0
    %147 = vmatprep.subr.mxu0 0.0
    %148 = vmatpush1.xpose.msra.mxu0 0.0
    %149 = vmatprep.subr.mxu0 0.0
    %150 = vmatpush1.xpose.msra.mxu0 0.0
    %151 = vmatprep.subr.mxu0 0.0
    %152 = vmatpush1.xpose.msra.mxu0 0.0
    %153 = vmatprep.subr.mxu0 0.0
    %154 = vmatpush1.xpose.msra.mxu0 0.0
    %155 = vmatprep.subr.mxu0 0.0
    %156 = vmatpush1.xpose.msra.mxu0 0.0
    %157 = vmatprep.subr.mxu0 0.0
    %158 = vmatpush1.xpose.msra.mxu0 0.0
    %159 = vmatprep.subr.mxu0 0.0
    %160 = vmatpush1.xpose.msra.mxu0 0.0
    %161 = vmatprep.subr.mxu0 0.0
    %162 = vmatpush1.xpose.msra.mxu0 0.0
    %163 = vmatprep.subr.mxu0 0.0
    %164 = vmatpush1.xpose.msra.mxu0 0.0
    %165 = vmatprep.subr.mxu0 0.0
    %166 = vmatpush1.xpose.msra.mxu0 0.0
    %167 = vmatprep.subr.mxu0 0.0
    %168 = vmatpush1.xpose.msra.mxu0 0.0
    %169 = vmatprep.subr.mxu0 0.0
    %170 = vmatpush1.xpose.msra.mxu0 0.0
    %171 = vmatprep.subr.mxu0 0.0
    %172 = vmatpush1.xpose.msra.mxu0 0.0
    %173 = vmatprep.subr.mxu0 0.0
    %174 = vmatpush1.xpose.msra.mxu0 0.0
    %175 = vmatprep.subr.mxu0 0.0
    %176 = vmatpush1.xpose.msra.mxu0 0.0
    %177 = vmatprep.subr.mxu0 0.0
    %178 = vmatpush1.xpose.msra.mxu0 0.0
    %179 = vmatprep.subr.mxu0 0.0
    %180 = vmatpush1.xpose.msra.mxu0 0.0
    %181 = vmatprep.subr.mxu0 0.0
    %182 = vmatpush1.xpose.msra.mxu0 0.0
    %183 = vmatprep.subr.mxu0 0.0
    %184 = vmatpush1.xpose.msra.mxu0 0.0
    %185 = vmatprep.subr.mxu0 0.0
    %186 = vmatpush1.xpose.msra.mxu0 0.0
    %187 = vmatprep.subr.mxu0 0.0
    %188 = vmatpush1.xpose.msra.mxu0 0.0
    %189 = vmatprep.mubr.f32.mxu0 0.0
    %190 = vmatmul.mubr.f32.gmra.mrb[0].mxu0 %v120
    %v191 = vpop.f32.mrb[0].mxu0
    %v192 = vadd.f32 %v116, %v191
    %v193 = vpop.f32.mrb[0].mxu0
    %194 = vdwg.mxu0
    %v196 = vrot.slane %v192, 1
    %v198 = vmax.f32 %v192, %v196
    %v199 = vsub.f32 %v192, %v198
    %v200 = vmul.f32 %v199, 1.442695
    %v201 = vpow.pop %v200
    %v203 = vrot.slane %v198, 7
    %v205 = vsub.f32 %v192, %v203
    %v206 = vmul.f32 %v205, 1.442695
    %v207 = vpow.pop %v206
    %v209 = vrot.slane %v207, 1
    %v211 = vadd.f32 %v201, %v209
    %v212 = vrcp.pop %v211
    %v213 = vmul.f32 1.0, %v212
    %v214 = vmul.f32 %v201, %v213
    %vm215 = vcmask 8192
    %216 = vst.msk [vmem:[#allocation2] sm:$0x1] %vm215, %v214
    %v218 = vrot.slane %v213, 7
    %v220 = vmul.f32 %v207, %v218
    %vm221 = vcmask 9217
    %222 = vst.msk [vmem:[#allocation2] sm:$0x2] %vm221, %v220
    // Predicated region
    $region22: #{tpu_custom_call.1} parent=1 // pred_check
      _
    $region23: #{tpu_custom_call.1} parent=1 // pred_check_branch
      %224 = sbr.rel (0) target = $region25
    $region24: #{tpu_custom_call.1} parent=1 // pred_region
      %s226 = ssub.s32 32, 32
      %227 = vsyncadd [#allocation3], %s226
      %s229 = sshll.u32 [#allocation2], 4
      %s230 = int_to_ptr.vmem [resolvable:$true] %s229
      %232 = dma.vmem_to_hbm [thread:$0]  %s230, 32, %s5, [#allocation3]
    $region25: #{tpu_custom_call.1} parent=1 // pred_fallthru
      _
    // Predicated region
    $region26: #{tpu_custom_call.1} parent=1 // pred_check
      _
    $region27: #{tpu_custom_call.1} parent=1 // pred_check_branch
      %234 = sbr.rel (0) target = $region29
    $region28: #{tpu_custom_call.1} parent=1 // pred_region
      %235 = dma.done [#allocation3], 32
    $region29: #{tpu_custom_call.1} parent=1 // pred_fallthru
      _
    %236 = vsyncpa [#allocation3], 1

</llo_original>
